<compile_context>
chip_gen: v7x
topology: tpu7x:2x2x1
jax: 0.10.0
libtpu: 0.0.40
codegen_flags: <defaults>
</compile_context>

<pallas_src>
import jax
import jax.numpy as jnp
from jax.experimental import pallas as pl
from jax.experimental.pallas import tpu as pltpu

_LANES = 128


# ----------------------------- kernel ---------------------------------------

def _gps_huber_partial_kernel(p_ref, t_ref, acc_ref):
    """Accumulate raw (unweighted) Huber terms into a resident (8,128) block."""
    @pl.when(pl.program_id(1) == 0)
    def _init():
        acc_ref[...] = jnp.zeros_like(acc_ref)

    # Upcast is a no-op for f32 inputs; lets bf16 inputs stream half the bytes.
    p = p_ref[...].astype(jnp.float32)
    t = t_ref[...].astype(jnp.float32)
    d = p - t
    ad = jnp.abs(d)
    q = jnp.minimum(ad, 1.0)
    h = q * (ad - 0.5 * q)            # branch-free Huber, delta = 1.0
    # Fold sublane groups into the (8,128) accumulator: the reshape only splits
    # the sublane-major axis (layout no-op) and the axis-0 sum is plain VPU adds.
    acc_ref[...] += jnp.sum(h.reshape(-1, 8, _LANES), axis=0)


# ----------------------------- helpers --------------------------------------

def _default_tile_rows():
    try:
        kind = jax.devices()[0].device_kind.lower()
    except Exception:
        kind = ""
    if "v7" in kind:
        return 8192   # 4 MiB/input block; 16 MiB double-buffered < 32 MiB scoped
    return 4096       # 2 MiB/input block; 8 MiB double-buffered < 16 MiB (v5e)


def _num_tensorcores():
    try:
        kind = jax.devices()[0].device_kind.lower()
    except Exception:
        return 1
    if "v7" in kind or "v4" in kind or "v5p" in kind:
        return 2      # megacore parts: shard the parallel grid axis across TCs
    return 1


def _huber_sums_xy(p2, t2):
    """Raw (unweighted, un-normalized) Huber sums for columns 0 and 1."""
    d = p2.astype(jnp.float32) - t2.astype(jnp.float32)
    ad = jnp.abs(d)
    q = jnp.minimum(ad, 1.0)
    h = q * (ad - 0.5 * q)
    return jnp.sum(h[:, 0]), jnp.sum(h[:, 1])


def _make_in_index_map(blocks_per_core):
    def idx(c, i):
        return (c * blocks_per_core + i, 0)
    return idx


# ----------------------------- wrapper ---------------------------------------

def gps_loss(y_pred, y_true, x_bias=1, y_bias=1, tile_s=None,
             min_kernel_elems=65536):
    assert y_pred.shape == y_true.shape
    assert y_pred.ndim == 2 and y_pred.shape[1] >= 2
    n_rows = y_pred.shape[0]
    total = 2 * n_rows

    # TODO(synk): for inputs with >2 columns the [:, :2] slice materializes a
    # strided copy; a direct (N, C) kernel path would avoid that extra pass.
    p2 = y_pred if y_pred.shape[1] == 2 else y_pred[:, :2]
    t2 = y_true if y_true.shape[1] == 2 else y_true[:, :2]

    if tile_s is None:
        tile_s = _default_tile_rows()
    tile_s = max(8, (int(tile_s) // 8) * 8)

    full_rows = total // _LANES          # complete 128-lane rows available
    if full_rows >= 8:                   # clamp so small inputs still fit a block
        tile_s = min(tile_s, (full_rows // 8) * 8)

    num_cores = _num_tensorcores()
    blocks_total = full_rows // tile_s
    if blocks_total < num_cores:
        num_cores = 1
    blocks_per_core = blocks_total // num_cores
    num_blocks = blocks_per_core * num_cores

    # Small-input fast path: a fused XLA reduction beats kernel launch cost.
    if num_blocks == 0 or total < min_kernel_elems:
        sx, sy = _huber_sums_xy(p2, t2)
        return (sx * x_bias + sy * y_bias) / n_rows

    prefix_rows = num_blocks * tile_s
    prefix_elems = prefix_rows * _LANES

    pf = p2.reshape(-1)
    tf = t2.reshape(-1)
    if prefix_elems != total:
        # Contiguous-prefix slice (worst case XLA inserts one prefix copy;
        # still cheaper than the old full-array jnp.pad, and zero when aligned).
        pf = pf[:prefix_elems]
        tf = tf[:prefix_elems]
    pf = pf.reshape(prefix_rows, _LANES)   # free bitcast (row-major, contiguous)
    tf = tf.reshape(prefix_rows, _LANES)

    in_idx = _make_in_index_map(blocks_per_core)

    acc = pl.pallas_call(
        _gps_huber_partial_kernel,
        out_shape=jax.ShapeDtypeStruct((num_cores * 8, _LANES), jnp.float32),
        grid_spec=pltpu.PrefetchScalarGridSpec(
            num_scalar_prefetch=0,
            grid=(num_cores, blocks_per_core),
            in_specs=[
                pl.BlockSpec((tile_s, _LANES), in_idx),
                pl.BlockSpec((tile_s, _LANES), in_idx),
            ],
            out_specs=pl.BlockSpec((8, _LANES), lambda c, i: (c, 0)),
        ),
        compiler_params=pltpu.CompilerParams(
            dimension_semantics=("parallel", "arbitrary"),
        ),
    )(pf, tf)

    # Flat stream is [x0, y0, x1, y1, ...] and 128 is even, so even lanes carry
    # x-coordinate Huber terms and odd lanes carry y terms.
    kx = jnp.sum(acc[:, 0::2])
    ky = jnp.sum(acc[:, 1::2])

    tail_row_start = prefix_elems // 2      # exact: prefix_elems is even
    if tail_row_start < n_rows:
        tx, ty = _huber_sums_xy(p2[tail_row_start:], t2[tail_row_start:])
        kx = kx + tx
        ky = ky + ty

    return (kx * x_bias + ky * y_bias) / n_rows


# ----------------------------- reference & tests -----------------------------

def _gps_loss_ref(y_pred, y_true, x_bias=1, y_bias=1):
    # Matches nn.HuberLoss(delta=1.0, reduction='mean') on each column.
    def huber_mean(p, t):
        d = p.astype(jnp.float32) - t.astype(jnp.float32)
        ad = jnp.abs(d)
        h = jnp.where(ad <= 1.0, 0.5 * d * d, ad - 0.5)
        return jnp.mean(h)
    return huber_mean(y_pred[:, 0], y_true[:, 0]) * x_bias + \
           huber_mean(y_pred[:, 1], y_true[:, 1]) * y_bias


if __name__ == "__main__":
    key = jax.random.PRNGKey(0)
    k1, k2, k3, k4, k5, k6 = jax.random.split(key, 6)

    # 1) Typical tiny GPS batch -> small-input fast path (fused XLA reduction).
    yp0 = jax.random.normal(k1, (8, 2), jnp.float32) * 2.0
    yt0 = jax.random.normal(k2, (8, 2), jnp.float32) * 2.0
    l0 = gps_loss(yp0, yt0, x_bias=1, y_bias=1)
    jax.block_until_ready(l0)
    r0 = _gps_loss_ref(yp0, yt0, 1, 1)
    assert jnp.allclose(l0, r0, rtol=1e-5, atol=1e-5), (l0, r0)

    # 2) Kernel path: multi-step grid, unaligned row count (prefix + JAX tail).
    yp1 = jax.random.normal(k3, (4200, 2), jnp.float32) * 3.0
    yt1 = jax.random.normal(k4, (4200, 2), jnp.float32) * 3.0
    l1 = gps_loss(yp1, yt1, x_bias=2, y_bias=3, tile_s=8, min_kernel_elems=0)
    jax.block_until_ready(l1)
    r1 = _gps_loss_ref(yp1, yt1, 2, 3)
    assert jnp.allclose(l1, r1, rtol=1e-4, atol=1e-5), (l1, r1)

    # 3) Kernel path: fully aligned rows (zero-copy bitcast reshape, no tail).
    yp2 = jax.random.normal(k5, (2048, 2), jnp.float32)
    yt2 = jax.random.normal(k6, (2048, 2), jnp.float32)
    l2 = gps_loss(yp2, yt2, x_bias=0.5, y_bias=1.5, tile_s=8, min_kernel_elems=0)
    jax.block_until_ready(l2)
    r2 = _gps_loss_ref(yp2, yt2, 0.5, 1.5)
    assert jnp.allclose(l2, r2, rtol=1e-4, atol=1e-5), (l2, r2)

    print("KERNEL_OK")
</pallas_src>

<mosaic_0001>
module attributes {stable_mosaic.version = 11 : i64} {
  func.func @_gps_huber_partial_kernel(%arg0: i32, %arg1: i32, %arg2: memref<8x128xf32, #tpu.memory_space<vmem>>, %arg3: memref<8x128xf32, #tpu.memory_space<vmem>>, %arg4: memref<8x128xf32, #tpu.memory_space<vmem>>) attributes {dimension_semantics = [#tpu.dimension_semantics<parallel>, #tpu.dimension_semantics<arbitrary>], iteration_bounds = array<i64: 1, 8>, scalar_prefetch = 0 : i64, scratch_operands = 0 : i64, tpu.core_type = #tpu.core_type<tc>, window_params = [{transform_indices = @transform_0, window_bounds = array<i64: 8, 128>}, {transform_indices = @transform_1, window_bounds = array<i64: 8, 128>}, {transform_indices = @transform_2, window_bounds = array<i64: 8, 128>}]} {
    %c0_i32 = arith.constant 0 : i32
    %0 = arith.cmpi eq, %arg1, %c0_i32 : i32
    %1 = arith.extui %0 : i1 to i32
    %c0_i32_0 = arith.constant 0 : i32
    %2 = arith.cmpi ne, %1, %c0_i32_0 : i32
    scf.if %2 {
      %cst_10 = arith.constant 0.000000e+00 : f32
      %18 = vector.broadcast %cst_10 : f32 to vector<8x128xf32>
      %c0_11 = arith.constant 0 : index
      %c0_12 = arith.constant 0 : index
      %19 = vector.load %arg4[%c0_11, %c0_12] : memref<8x128xf32, #tpu.memory_space<vmem>>, vector<8x128xf32>
      tpu.vector_store %arg4[%c0_11, %c0_12], %18 {strides = array<i32>} : memref<8x128xf32, #tpu.memory_space<vmem>>, vector<8x128xf32>,
    } else {
    }
    %c0 = arith.constant 0 : index
    %c0_1 = arith.constant 0 : index
    %3 = vector.load %arg2[%c0, %c0_1] : memref<8x128xf32, #tpu.memory_space<vmem>>, vector<8x128xf32>
    %c0_2 = arith.constant 0 : index
    %c0_3 = arith.constant 0 : index
    %4 = vector.load %arg3[%c0_2, %c0_3] : memref<8x128xf32, #tpu.memory_space<vmem>>, vector<8x128xf32>
    %5 = arith.subf %3, %4 : vector<8x128xf32>
    %6 = math.absf %5 : vector<8x128xf32>
    %cst = arith.constant 1.000000e+00 : f32
    %7 = vector.broadcast %cst : f32 to vector<8x128xf32>
    %8 = arith.minimumf %6, %7 : vector<8x128xf32>
    %cst_4 = arith.constant 5.000000e-01 : f32
    %9 = vector.broadcast %cst_4 : f32 to vector<8x128xf32>
    %10 = arith.mulf %9, %8 : vector<8x128xf32>
    %11 = arith.subf %6, %10 : vector<8x128xf32>
    %12 = arith.mulf %8, %11 : vector<8x128xf32>
    %c0_5 = arith.constant 0 : index
    %c0_6 = arith.constant 0 : index
    %13 = vector.load %arg4[%c0_5, %c0_6] : memref<8x128xf32, #tpu.memory_space<vmem>>, vector<8x128xf32>
    %14 = vector.shape_cast %12 : vector<8x128xf32> to vector<1x8x128xf32>
    %cst_7 = arith.constant dense<0.000000e+00> : vector<8x128xf32>
    %15 = vector.multi_reduction <add>, %14, %cst_7 [0] : vector<1x8x128xf32> to vector<8x128xf32>
    %16 = arith.addf %13, %15 : vector<8x128xf32>
    %c0_8 = arith.constant 0 : index
    %c0_9 = arith.constant 0 : index
    %17 = vector.load %arg4[%c0_8, %c0_9] : memref<8x128xf32, #tpu.memory_space<vmem>>, vector<8x128xf32>
    tpu.vector_store %arg4[%c0_8, %c0_9], %16 {strides = array<i32>} : memref<8x128xf32, #tpu.memory_space<vmem>>, vector<8x128xf32>,
    return
  }
  func.func @transform_0(%arg0: i32, %arg1: i32) -> (i32, i32) {
    %c8_i32 = arith.constant 8 : i32
    %0 = arith.muli %arg0, %c8_i32 : i32
    %1 = arith.addi %0, %arg1 : i32
    %c0_i32 = arith.constant 0 : i32
    %c0_i32_0 = arith.constant 0 : i32
    return %1, %c0_i32 : i32, i32
  }
  func.func @transform_1(%arg0: i32, %arg1: i32) -> (i32, i32) {
    %c8_i32 = arith.constant 8 : i32
    %0 = arith.muli %arg0, %c8_i32 : i32
    %1 = arith.addi %0, %arg1 : i32
    %c0_i32 = arith.constant 0 : i32
    %c0_i32_0 = arith.constant 0 : i32
    return %1, %c0_i32 : i32, i32
  }
  func.func @transform_2(%arg0: i32, %arg1: i32) -> (i32, i32) {
    %c0_i32 = arith.constant 0 : i32
    %c0_i32_0 = arith.constant 0 : i32
    return %arg0, %c0_i32 : i32, i32
  }
}

</mosaic_0001>

<llo_original>
// kernel: tpu_custom_call.1
$region0: #{tpu_custom_call.1}
  #allocation0 [shape = 'u32[]', space=smem, size = 0x4, offset = 0x4, fixed_abs, tag = 'smem constant byte address 0x4 - core index']
  #allocation1 [shape = 'u32[144,128]{1,0:T(1,128)}', space=vmem, size = 0x12000, scoped, tag = 'internal scratch']
  %s0 = inlined_call_operand.hbm [shape: f32[64,128], index: 0, kind: input, shape index: {}]
  %s1 = inlined_call_operand.hbm [shape: f32[64,128], index: 1, kind: input, shape index: {}]
  %s2 = inlined_call_operand.hbm [shape: f32[8,128], index: 2, kind: output, shape index: {}]
  %s3 = sld [smem:[#allocation0]]
  $region53: #{tpu_custom_call.1} parent=0
    _
  %s5 = ssub.s32 1, %s3
  %s6 = scalar_select 0, %s5, %s3
  $region1: #{tpu_custom_call.1} parent=0
    #allocation2 [shape = 'u8[8192]{0}', space=vmem, size = 0x2000, scoped, tag = 'input window, operand 0']
    #allocation3 [shape = 's32[2]{0}', space=sflag, size = 0x8, scoped, tag = 'scoped memory for tpu_custom_call.1']
    #allocation4 [shape = 's32[2]{0}', space=sflag, size = 0x8, scoped, tag = 'scoped memory for tpu_custom_call.1']
    #allocation5 [shape = 'u8[8192]{0}', space=vmem, size = 0x2000, scoped, tag = 'input window, operand 1']
    #allocation6 [shape = 's32[2]{0}', space=sflag, size = 0x8, scoped, tag = 'scoped memory for tpu_custom_call.1']
    #allocation7 [shape = 'u8[4096]{0}', space=vmem, size = 0x1000, scoped, tag = 'output window, operand 0, single buffered']
    %7 = vsyncpa [#allocation3], 0
    %s8 = scalar_lea.sflag [#allocation3], 1
    %9 = vsyncpa %s8, 0
    %10 = vsyncpa [#allocation6], 0
    %s11 = scalar_lea.sflag [#allocation6], 1
    %12 = vsyncpa %s11, 0
    %13 = vsyncpa [#allocation4], 0
    loop: start=0, step=1, limit=10
    $region2: #{tpu_custom_call.1} parent=1 // loop_pre_header
      _
    $region3: #{tpu_custom_call.1} parent=1 // loop_header
      %s15 = sphi 0, %s19
      %p16 = scmp.ge.s32.totalorder %s15, 10
      %s22 = sphi 0, %s34
      %s23 = sphi 0, %s30
      %s24 = sphi 0, %s22
      %s25 = sphi 0, %s23
      %s26 = sphi 0, %s24
      %s27 = sphi 0, %s25
      %s41 = sphi 0, %s43
      %s44 = sphi 0, %s41
      %s45 = sphi 0, %s44
      %s61 = sphi 0, %s45
      %s71 = sphi 0, %s73
      %s74 = sphi 0, %s71
      %s75 = sphi 0, %s74
      %s91 = sphi 0, %s75
      %s97 = sphi 0, %s99
      %s100 = sphi 0, %s97
      %s101 = sphi 0, %s100
      %s117 = sphi 0, %s101
    $region4: #{tpu_custom_call.1} parent=1 // loop_header_branch
      %18 = sbr.rel (%p16) target = $region8
    $region5: #{tpu_custom_call.1} parent=1 // loop_body
      %s20 = ssub.s32 %s15, 1
      %s21 = ssub.s32 %s15, 2
      %s28 = sadd.s32 1, %s23
      %p29 = scmp.ge.s32.totalorder %s28, 8
      %s30 = scalar_select %p29, 0, %s28
      %s31 = sadd.s32 1, %s22
      %s32 = scalar_select %p29, %s31, %s22
      %p33 = scmp.ge.s32.totalorder %s32, 1
      %s34 = scalar_select %p33, 0, %s32
      %s35 = smul.u32 %s22, 8
      %s36 = sadd.s32 %s35, %s23
      %s37 = smul.u32 %s34, 8
      %s38 = sadd.s32 %s37, %s30
      %s39 = ssub.s32 %s36, %s38
      %p40 = scmp.eq.s32.totalorder %s39, 0
      %s42 = sadd.s32 %s41, 1
      %s43 = scalar_select %p40, %s41, %s42
      %p46 = pneg %p40
      %p47 = scmp.eq.s32.totalorder %s15, 7
      %p48 = por %p46, %p47
      %p49 = scmp.ne.s32.totalorder %s41, %s44
      %p50 = scmp.eq.s32.totalorder %s15, 0
      %p51 = por %p49, %p50
      %p52 = scmp.ne.s32.totalorder %s41, %s44
      %p53 = scmp.eq.s32.totalorder %s20, 7
      %p54 = por %p52, %p53
      %p55 = scmp.ne.s32.totalorder %s44, %s45
      %p56 = scmp.eq.s32.totalorder %s20, 0
      %p57 = por %p55, %p56
      %p58 = scmp.ne.s32.totalorder %s44, %s45
      %p59 = scmp.eq.s32.totalorder %s21, 7
      %p60 = por %p58, %p59
      %p62 = scmp.ne.s32.totalorder %s45, %s61
      %p63 = scmp.eq.s32.totalorder %s21, 0
      %p64 = por %p62, %p63
      %s65 = smul.u32 %s22, 8
      %s66 = sadd.s32 %s65, %s23
      %s67 = smul.u32 %s34, 8
      %s68 = sadd.s32 %s67, %s30
      %s69 = ssub.s32 %s66, %s68
      %p70 = scmp.eq.s32.totalorder %s69, 0
      %s72 = sadd.s32 %s71, 1
      %s73 = scalar_select %p70, %s71, %s72
      %p76 = pneg %p70
      %p77 = scmp.eq.s32.totalorder %s15, 7
      %p78 = por %p76, %p77
      %p79 = scmp.ne.s32.totalorder %s71, %s74
      %p80 = scmp.eq.s32.totalorder %s15, 0
      %p81 = por %p79, %p80
      %p82 = scmp.ne.s32.totalorder %s71, %s74
      %p83 = scmp.eq.s32.totalorder %s20, 7
      %p84 = por %p82, %p83
      %p85 = scmp.ne.s32.totalorder %s74, %s75
      %p86 = scmp.eq.s32.totalorder %s20, 0
      %p87 = por %p85, %p86
      %p88 = scmp.ne.s32.totalorder %s74, %s75
      %p89 = scmp.eq.s32.totalorder %s21, 7
      %p90 = por %p88, %p89
      %p92 = scmp.ne.s32.totalorder %s75, %s91
      %p93 = scmp.eq.s32.totalorder %s21, 0
      %p94 = por %p92, %p93
      %s95 = ssub.s32 %s22, %s34
      %p96 = scmp.eq.s32.totalorder %s95, 0
      %s98 = sadd.s32 %s97, 1
      %s99 = scalar_select %p96, %s97, %s98
      %p102 = pneg %p96
      %p103 = scmp.eq.s32.totalorder %s15, 7
      %p104 = por %p102, %p103
      %p105 = scmp.ne.s32.totalorder %s97, %s100
      %p106 = scmp.eq.s32.totalorder %s15, 0
      %p107 = por %p105, %p106
      %p108 = scmp.ne.s32.totalorder %s97, %s100
      %p109 = scmp.eq.s32.totalorder %s20, 7
      %p110 = por %p108, %p109
      %p111 = scmp.ne.s32.totalorder %s100, %s101
      %p112 = scmp.eq.s32.totalorder %s20, 0
      %p113 = por %p111, %p112
      %p114 = scmp.ne.s32.totalorder %s100, %s101
      %p115 = scmp.eq.s32.totalorder %s21, 7
      %p116 = por %p114, %p115
      %p118 = scmp.ne.s32.totalorder %s101, %s117
      %p119 = scmp.eq.s32.totalorder %s21, 0
      %p120 = por %p118, %p119
      %p121 = scmp.le.s32.totalorder 1, %s15
      %p122 = scmp.lt.s32.totalorder %s15, 9
      %p123 = pnand %p121, %p122
      %p124 = pneg %p123
      // Predicated region
      $region9: #{tpu_custom_call.1} parent=5 // pred_check
        _
      $region10: #{tpu_custom_call.1} parent=5 // pred_check_branch
        %126 = sbr.rel (%p123) target = $region12
      $region11: #{tpu_custom_call.1} parent=5 // pred_region
        %s127 = ssub.s32 %s15, 1
      $region12: #{tpu_custom_call.1} parent=5 // pred_fallthru
        _
      %p128 = scmp.lt.s32.totalorder %s15, 8
      // Predicated region
      $region13: #{tpu_custom_call.1} parent=5 // pred_check
        %p129 = pneg %p128
      $region14: #{tpu_custom_call.1} parent=5 // pred_check_branch
        %131 = sbr.rel (%p129) target = $region16
      $region15: #{tpu_custom_call.1} parent=5 // pred_region
        // Predicated region
        $region17: #{tpu_custom_call.1} parent=15 // pred_check
          %p132 = pneg %p51
        $region18: #{tpu_custom_call.1} parent=15 // pred_check_branch
          %134 = sbr.rel (%p132) target = $region20
        $region19: #{tpu_custom_call.1} parent=15 // pred_region
          %s135 = sand.u32 %s41, 1
          %s136 = scalar_lea.sflag [#allocation3], %s135
          %s137 = sand.u32 %s41, 1
          %s138 = smul.addr %s137, 8
          %s139 = scalar_lea.vmem [#allocation2], %s138
          %s140 = smul.u32 %s22, 8
          %s141 = sadd.s32 %s140, %s23
          %s143 = ssub.s32 128, 128
          %144 = vsyncadd %s136, %s143
          %s145 = smul.addr %s141, 128
          %s146 = scalar_lea.hbm %s0, %s145
          %s148 = sshll.u32 %s139, 4
          %s149 = int_to_ptr.vmem [resolvable:$true] %s148
          %151 = dma.hbm_to_vmem [thread:$0]  %s146, 128, %s149, %s136
        $region20: #{tpu_custom_call.1} parent=15 // pred_fallthru
          _
        // Predicated region
        $region21: #{tpu_custom_call.1} parent=15 // pred_check
          %p152 = pneg %p81
        $region22: #{tpu_custom_call.1} parent=15 // pred_check_branch
          %154 = sbr.rel (%p152) target = $region24
        $region23: #{tpu_custom_call.1} parent=15 // pred_region
          %s155 = sand.u32 %s71, 1
          %s156 = scalar_lea.sflag [#allocation6], %s155
          %s157 = sand.u32 %s71, 1
          %s158 = smul.addr %s157, 8
          %s159 = scalar_lea.vmem [#allocation5], %s158
          %s160 = smul.u32 %s22, 8
          %s161 = sadd.s32 %s160, %s23
          %s163 = ssub.s32 128, 128
          %164 = vsyncadd %s156, %s163
          %s165 = smul.addr %s161, 128
          %s166 = scalar_lea.hbm %s1, %s165
          %s168 = sshll.u32 %s159, 4
          %s169 = int_to_ptr.vmem [resolvable:$true] %s168
          %171 = dma.hbm_to_vmem [thread:$0]  %s166, 128, %s169, %s156
        $region24: #{tpu_custom_call.1} parent=15 // pred_fallthru
          _
      $region16: #{tpu_custom_call.1} parent=5 // pred_fallthru
        _
      %p172 = scmp.le.s32.totalorder 1, %s15
      %p173 = scmp.lt.s32.totalorder %s15, 9
      %p174 = pnand %p172, %p173
      %p175 = pneg %p174
      // Predicated region
      $region25: #{tpu_custom_call.1} parent=5 // pred_check
        _
      $region26: #{tpu_custom_call.1} parent=5 // pred_check_branch
        %177 = sbr.rel (%p174) target = $region28
      $region27: #{tpu_custom_call.1} parent=5 // pred_region
        %s178 = ssub.s32 %s15, 1
        %s179 = sand.u32 %s44, 1
        %s180 = scalar_lea.sflag [#allocation3], %s179
        %s181 = sand.u32 %s44, 1
        %s182 = smul.addr %s181, 8
        %s183 = scalar_lea.vmem [#allocation2], %s182
        // Predicated region
        $region29: #{tpu_custom_call.1} parent=27 // pred_check
          %p184 = pneg %p57
        $region30: #{tpu_custom_call.1} parent=27 // pred_check_branch
          %186 = sbr.rel (%p184) target = $region32
        $region31: #{tpu_custom_call.1} parent=27 // pred_region
          %187 = dma.done %s180, 128
        $region32: #{tpu_custom_call.1} parent=27 // pred_fallthru
          _
        %s188 = sand.u32 %s74, 1
        %s189 = scalar_lea.sflag [#allocation6], %s188
        %s190 = sand.u32 %s74, 1
        %s191 = smul.addr %s190, 8
        %s192 = scalar_lea.vmem [#allocation5], %s191
        // Predicated region
        $region33: #{tpu_custom_call.1} parent=27 // pred_check
          %p193 = pneg %p87
        $region34: #{tpu_custom_call.1} parent=27 // pred_check_branch
          %195 = sbr.rel (%p193) target = $region36
        $region35: #{tpu_custom_call.1} parent=27 // pred_region
          %196 = dma.done %s189, 128
        $region36: #{tpu_custom_call.1} parent=27 // pred_fallthru
          _
        %s197 = sand.u32 %s44, 1
        %s198 = scalar_lea.sflag [#allocation3], %s197
        %s199 = sand.u32 %s44, 1
        %s200 = smul.addr %s199, 8
        %s201 = scalar_lea.vmem [#allocation2], %s200
        %p202 = pneg %p57
        %p203 = pneg %p54
        %s204 = sand.u32 %s74, 1
        %s205 = scalar_lea.sflag [#allocation6], %s204
        %s206 = sand.u32 %s74, 1
        %s207 = smul.addr %s206, 8
        %s208 = scalar_lea.vmem [#allocation5], %s207
        %p209 = pneg %p87
        %p210 = pneg %p84
        %p211 = pneg %p113
        %p212 = pneg %p110
        %s213 = smul.u32 %s24, 8
        %s214 = sadd.s32 %s213, %s25
        %s215 = smul.u32 %s24, 8
        %s216 = sadd.s32 %s215, %s25
        %p217 = scmp.eq.s32.totalorder %s25, 0
        // Predicated region
        $region37: #{tpu_custom_call.1} parent=27 // pred_check
          %p218 = pneg %p217
        $region38: #{tpu_custom_call.1} parent=27 // pred_check_branch
          %220 = sbr.rel (%p218) target = $region40
        $region39: #{tpu_custom_call.1} parent=27 // pred_region
          %221 = vst [vmem:[#allocation7] sm:$0xff] 0.0
        $region40: #{tpu_custom_call.1} parent=27 // pred_fallthru
          _
        %v222 = vld [vmem:[%s183] sm:$0xff]
        %v223 = vld [vmem:[%s192] sm:$0xff]
        %v224 = vsub.f32 %v222, %v223
        %v225 = vand.u32 2147483647, %v224
        %v226 = vmin.f32 %v225, 1.0
        %v227 = vmul.f32 %v226, 0.5
        %v228 = vsub.f32 %v225, %v227
        %v229 = vmul.f32 %v226, %v228
        %v230 = vld [vmem:[#allocation7] sm:$0xff]
        %v231 = vadd.f32 %v229, 0.0
        %v232 = vadd.f32 %v230, %v231
        %233 = vst [vmem:[#allocation7] sm:$0xff] %v232
        // Predicated region
        $region41: #{tpu_custom_call.1} parent=27 // pred_check
          %p234 = pneg %p110
        $region42: #{tpu_custom_call.1} parent=27 // pred_check_branch
          %236 = sbr.rel (%p234) target = $region44
        $region43: #{tpu_custom_call.1} parent=27 // pred_region
          %s238 = ssub.s32 128, 128
          %239 = vsyncadd [#allocation4], %s238
          %s240 = smul.addr %s24, 128
          %s241 = scalar_lea.hbm %s2, %s240
          %s243 = sshll.u32 [#allocation7], 4
          %s244 = int_to_ptr.vmem [resolvable:$true] %s243
          %246 = dma.vmem_to_hbm [thread:$0]  %s244, 128, %s241, [#allocation4]
        $region44: #{tpu_custom_call.1} parent=27 // pred_fallthru
          _
        // Predicated region
        $region45: #{tpu_custom_call.1} parent=27 // pred_check
          %p247 = pneg %p110
        $region46: #{tpu_custom_call.1} parent=27 // pred_check_branch
          %249 = sbr.rel (%p247) target = $region48
        $region47: #{tpu_custom_call.1} parent=27 // pred_region
          %250 = dma.done [#allocation4], 128
        $region48: #{tpu_custom_call.1} parent=27 // pred_fallthru
          _
      $region28: #{tpu_custom_call.1} parent=5 // pred_fallthru
        _
      %p251 = scmp.le.s32.totalorder 2, %s15
      // Predicated region
      $region49: #{tpu_custom_call.1} parent=5 // pred_check
        %p252 = pneg %p251
      $region50: #{tpu_custom_call.1} parent=5 // pred_check_branch
        %254 = sbr.rel (%p252) target = $region52
      $region51: #{tpu_custom_call.1} parent=5 // pred_region
        %s255 = ssub.s32 %s15, 2
      $region52: #{tpu_custom_call.1} parent=5 // pred_fallthru
        _
    $region6: #{tpu_custom_call.1} parent=1 // loop_footer
      %s19 = sadd.s32 1, %s15
    $region7: #{tpu_custom_call.1} parent=1 // loop_footer_branch
      %14 = sbr.rel target = $region3
    $region8: #{tpu_custom_call.1} parent=1 // loop_exit
      _
    %256 = vsyncpa [#allocation3], 1
    %s257 = scalar_lea.sflag [#allocation3], 1
    %258 = vsyncpa %s257, 1
    %259 = vsyncpa [#allocation6], 1
    %s260 = scalar_lea.sflag [#allocation6], 1
    %261 = vsyncpa %s260, 1
    %262 = vsyncpa [#allocation4], 1
    %s263 = scalar_lea.sflag [#allocation4], 1
    %264 = vsyncpa %s263, 1

</llo_original>
